<compile_context>
chip_gen: v6e
topology: v6e:2x2x1
jax: 0.10.0
libtpu: 0.0.40
codegen_flags: <defaults>
</compile_context>

<pallas_src>
import functools

import jax
import jax.numpy as jnp
from jax.experimental import pallas as pl
from jax.experimental.pallas import tpu as pltpu


def _round_up(n, m):
    return ((n + m - 1) // m) * m


def _autoencoder_kernel(x_ref,
                        w1_ref, b1_ref,
                        w2_ref, b2_ref,
                        w3_ref, b3_ref,
                        w4_ref, b4_ref,
                        recon_ref, z_ref, *, compute_dtype):
    cd = compute_dtype
    x = x_ref[...].astype(cd)

    # ----- encoder -----
    h1 = jnp.dot(x, w1_ref[...], preferred_element_type=jnp.float32) + b1_ref[...]
    h1 = jnp.maximum(h1, 0.0)                                    # ReLU (f32)
    z = jnp.dot(h1.astype(cd), w2_ref[...],
                preferred_element_type=jnp.float32) + b2_ref[...]

    # ----- decoder -----
    h2 = jnp.dot(z.astype(cd), w3_ref[...],
                 preferred_element_type=jnp.float32) + b3_ref[...]
    h2 = jnp.maximum(h2, 0.0)                                    # ReLU (f32)
    recon = jnp.dot(h2.astype(cd), w4_ref[...],
                    preferred_element_type=jnp.float32) + b4_ref[...]

    z_ref[...] = z.astype(z_ref.dtype)
    recon_ref[...] = recon.astype(recon_ref.dtype)


def autoencoder_forward(x, params, *, block_rows=1024,
                        compute_dtype=jnp.bfloat16,
                        vmem_budget_bytes=48 * (1 << 20)):
    """x: [B, input_dim] float32.  Returns (recon [B, input_dim] f32,
    z [B, latent_dim] f32).

    compute_dtype: dtype of the MXU operands (weights + dot inputs).
      bf16 (default) halves dot-operand traffic and runs the MXU at its bf16
      rate; accumulation and outputs stay f32.  Use jnp.float32 for
      bit-faithful parity with the f32 PyTorch module.
    block_rows: upper bound on the batch tile; the actual TB is derived from
      the tile footprint vs. vmem_budget_bytes (48 MiB default is safe for
      v7x's 64 MiB/TC VMEM and overrides v5e/v6e scoped defaults explicitly).
    """
    B, D = x.shape
    H = params["w1"].shape[1]      # hidden = 128
    L = params["w2"].shape[1]      # latent_dim

    cd = jnp.dtype(compute_dtype)

    # Weights in compute dtype (bf16 by default); biases stay f32 (tiny, and
    # added to the f32 accumulator).  This is a one-time cast of a few KiB-MiB
    # of weights, negligible vs. the x/recon streams; store params in bf16
    # directly in production to avoid it entirely.
    w1 = params["w1"].astype(cd)
    w2 = params["w2"].astype(cd)
    w3 = params["w3"].astype(cd)
    w4 = params["w4"].astype(cd)
    b1 = params["b1"].astype(jnp.float32)
    b2 = params["b2"].astype(jnp.float32)
    b3 = params["b3"].astype(jnp.float32)
    b4 = params["b4"].astype(jnp.float32)

    # ---- derive batch tile TB from the VMEM footprint ----
    x_bytes = jnp.dtype(x.dtype).itemsize
    w_bytes = cd.itemsize
    out_bytes = 4                                     # recon / z emitted f32
    # Double-buffered streaming tiles: x in, recon out, z out.
    per_row_stream = 2 * (D * x_bytes + D * out_bytes + L * out_bytes)
    # Resident weights + biases (conservatively assume 2 buffers each).
    resident = 2 * ((D * H + H * L + L * H + H * D) * w_bytes
                    + (H + L + H + D) * 4)
    avail = max(vmem_budget_bytes - resident, per_row_stream * 8)
    tb = (avail // per_row_stream) // 8 * 8
    tb = int(max(8, min(block_rows, tb, _round_up(B, 8))))

    grid = (pl.cdiv(B, tb),)

    # Generous allowance for in-kernel f32/bf16 activation temporaries.
    act_scratch = 6 * tb * H * 4
    footprint = per_row_stream * tb + resident + act_scratch
    vmem_limit = int(min(max(footprint + (4 << 20), 32 << 20), 56 << 20))

    # Batch-tiled arrays advance with the grid; weights/biases use a constant
    # block index (DMA'd once, resident in VMEM across the grid).  Trailing
    # dims use the full array extent, so no lane padding / wrapper pad-slice
    # passes are needed even for ragged D / L.
    tiled = lambda rows, cols: pl.BlockSpec((rows, cols), lambda i: (i, 0))
    whole = lambda arr: pl.BlockSpec(arr.shape, lambda i: (0, 0))

    kernel = functools.partial(_autoencoder_kernel, compute_dtype=cd)

    recon, z = pl.pallas_call(
        kernel,
        out_shape=(jax.ShapeDtypeStruct((B, D), jnp.float32),
                   jax.ShapeDtypeStruct((B, L), jnp.float32)),
        grid=grid,
        in_specs=[tiled(tb, D),
                  whole(w1), whole(b1),
                  whole(w2), whole(b2),
                  whole(w3), whole(b3),
                  whole(w4), whole(b4)],
        out_specs=(tiled(tb, D), tiled(tb, L)),
        compiler_params=pltpu.CompilerParams(
            dimension_semantics=("parallel",),
            vmem_limit_bytes=vmem_limit),
    )(x, w1, b1, w2, b2, w3, b3, w4, b4)

    return recon, z


def init_params(key, input_dim, latent_dim=10, hidden=128):
    """Deterministic init matching PyTorch nn.Linear default
    (U[-1/sqrt(fan_in), +1/sqrt(fan_in)]).  Weights stored as
    [in_features, out_features] (transposed vs. torch)."""
    ks = jax.random.split(key, 8)

    def linear(kw, kb, fan_in, fan_out):
        bound = 1.0 / jnp.sqrt(fan_in)
        w = jax.random.uniform(kw, (fan_in, fan_out), jnp.float32, -bound, bound)
        b = jax.random.uniform(kb, (1, fan_out), jnp.float32, -bound, bound)
        return w, b

    w1, b1 = linear(ks[0], ks[1], input_dim, hidden)
    w2, b2 = linear(ks[2], ks[3], hidden, latent_dim)
    w3, b3 = linear(ks[4], ks[5], latent_dim, hidden)
    w4, b4 = linear(ks[6], ks[7], hidden, input_dim)
    return {"w1": w1, "b1": b1, "w2": w2, "b2": b2,
            "w3": w3, "b3": b3, "w4": w4, "b4": b4}


def _reference_forward(x, p, compute_dtype=jnp.float32):
    """Pure-JAX reference mirroring the kernel's cast/accumulate structure."""
    cd = jnp.dtype(compute_dtype)
    w1 = p["w1"].astype(cd); w2 = p["w2"].astype(cd)
    w3 = p["w3"].astype(cd); w4 = p["w4"].astype(cd)
    h1 = jnp.maximum(
        jnp.dot(x.astype(cd), w1, preferred_element_type=jnp.float32) + p["b1"], 0.0)
    z = jnp.dot(h1.astype(cd), w2, preferred_element_type=jnp.float32) + p["b2"]
    h2 = jnp.maximum(
        jnp.dot(z.astype(cd), w3, preferred_element_type=jnp.float32) + p["b3"], 0.0)
    recon = jnp.dot(h2.astype(cd), w4, preferred_element_type=jnp.float32) + p["b4"]
    return recon, z


if __name__ == "__main__":
    key = jax.random.PRNGKey(0)
    k_x, k_p = jax.random.split(key)

    B, input_dim, latent_dim = 8, 32, 10
    x = jax.random.normal(k_x, (B, input_dim), dtype=jnp.float32)
    params = init_params(k_p, input_dim, latent_dim)

    # Default bf16-operand path.
    recon, z = autoencoder_forward(x, params)
    jax.block_until_ready((recon, z))
    assert recon.shape == (B, input_dim) and z.shape == (B, latent_dim)

    recon_bref, z_bref = _reference_forward(x, params, compute_dtype=jnp.bfloat16)
    recon_fref, z_fref = _reference_forward(x, params, compute_dtype=jnp.float32)
    assert jnp.allclose(recon, recon_bref, atol=1e-4, rtol=1e-4)
    assert jnp.allclose(z, z_bref, atol=1e-4, rtol=1e-4)
    assert jnp.allclose(recon, recon_fref, atol=5e-2, rtol=5e-2)
    assert jnp.allclose(z, z_fref, atol=5e-2, rtol=5e-2)

    # f32 path: bit-faithful to the f32 PyTorch module.
    recon32, z32 = autoencoder_forward(x, params, compute_dtype=jnp.float32)
    jax.block_until_ready((recon32, z32))
    assert jnp.allclose(recon32, recon_fref, atol=1e-5, rtol=1e-5)
    assert jnp.allclose(z32, z_fref, atol=1e-5, rtol=1e-5)

    print("KERNEL_OK")
</pallas_src>

<mosaic_0001>
module attributes {stable_mosaic.version = 11 : i64} {
  func.func @_autoencoder_kernel(%arg0: i32, %arg1: memref<8x32xf32, #tpu.memory_space<vmem>>, %arg2: memref<32x128xbf16, #tpu.memory_space<vmem>>, %arg3: memref<1x128xf32, #tpu.memory_space<vmem>>, %arg4: memref<128x10xbf16, #tpu.memory_space<vmem>>, %arg5: memref<1x10xf32, #tpu.memory_space<vmem>>, %arg6: memref<10x128xbf16, #tpu.memory_space<vmem>>, %arg7: memref<1x128xf32, #tpu.memory_space<vmem>>, %arg8: memref<128x32xbf16, #tpu.memory_space<vmem>>, %arg9: memref<1x32xf32, #tpu.memory_space<vmem>>, %arg10: memref<8x32xf32, #tpu.memory_space<vmem>>, %arg11: memref<8x10xf32, #tpu.memory_space<vmem>>) attributes {dimension_semantics = [#tpu.dimension_semantics<parallel>], iteration_bounds = array<i64: 1>, scalar_prefetch = 0 : i64, scratch_operands = 0 : i64, tpu.core_type = #tpu.core_type<tc>, window_params = [{transform_indices = @transform_0, window_bounds = array<i64: 8, 32>}, {pipeline_mode = #tpu.pipeline_mode<synchronous>, transform_indices = @transform_1, window_bounds = array<i64: 32, 128>}, {pipeline_mode = #tpu.pipeline_mode<synchronous>, transform_indices = @transform_2, window_bounds = array<i64: 1, 128>}, {pipeline_mode = #tpu.pipeline_mode<synchronous>, transform_indices = @transform_3, window_bounds = array<i64: 128, 10>}, {pipeline_mode = #tpu.pipeline_mode<synchronous>, transform_indices = @transform_4, window_bounds = array<i64: 1, 10>}, {pipeline_mode = #tpu.pipeline_mode<synchronous>, transform_indices = @transform_5, window_bounds = array<i64: 10, 128>}, {pipeline_mode = #tpu.pipeline_mode<synchronous>, transform_indices = @transform_6, window_bounds = array<i64: 1, 128>}, {pipeline_mode = #tpu.pipeline_mode<synchronous>, transform_indices = @transform_7, window_bounds = array<i64: 128, 32>}, {pipeline_mode = #tpu.pipeline_mode<synchronous>, transform_indices = @transform_8, window_bounds = array<i64: 1, 32>}, {transform_indices = @transform_9, window_bounds = array<i64: 8, 32>}, {transform_indices = @transform_10, window_bounds = array<i64: 8, 10>}]} {
    %c0 = arith.constant 0 : index
    %c0_0 = arith.constant 0 : index
    %0 = vector.load %arg1[%c0, %c0_0] : memref<8x32xf32, #tpu.memory_space<vmem>>, vector<8x32xf32>
    %1 = arith.truncf %0 : vector<8x32xf32> to vector<8x32xbf16>
    %c0_1 = arith.constant 0 : index
    %c0_2 = arith.constant 0 : index
    %2 = vector.load %arg2[%c0_1, %c0_2] : memref<32x128xbf16, #tpu.memory_space<vmem>>, vector<32x128xbf16>
    %cst = arith.constant dense<0.000000e+00> : vector<8x128xf32>
    %3 = tpu.matmul %1, %2, %cst {dimension_numbers = #tpu.dot_dimension_numbers<[1], [0], [0], [1], [0, 0, 1, 1], [], []>} : vector<8x32xbf16>, vector<32x128xbf16>, vector<8x128xf32> -> vector<8x128xf32>
    %c0_3 = arith.constant 0 : index
    %c0_4 = arith.constant 0 : index
    %4 = vector.load %arg3[%c0_3, %c0_4] : memref<1x128xf32, #tpu.memory_space<vmem>>, vector<1x128xf32>
    %5 = vector.broadcast %4 : vector<1x128xf32> to vector<8x128xf32>
    %6 = arith.addf %3, %5 : vector<8x128xf32>
    %cst_5 = arith.constant 0.000000e+00 : f32
    %7 = vector.broadcast %cst_5 : f32 to vector<8x128xf32>
    %8 = arith.maximumf %6, %7 : vector<8x128xf32>
    %9 = arith.truncf %8 : vector<8x128xf32> to vector<8x128xbf16>
    %c0_6 = arith.constant 0 : index
    %c0_7 = arith.constant 0 : index
    %10 = vector.load %arg4[%c0_6, %c0_7] : memref<128x10xbf16, #tpu.memory_space<vmem>>, vector<128x10xbf16>
    %cst_8 = arith.constant dense<0.000000e+00> : vector<8x10xf32>
    %11 = tpu.matmul %9, %10, %cst_8 {dimension_numbers = #tpu.dot_dimension_numbers<[1], [0], [0], [1], [0, 0, 1, 1], [], []>} : vector<8x128xbf16>, vector<128x10xbf16>, vector<8x10xf32> -> vector<8x10xf32>
    %c0_9 = arith.constant 0 : index
    %c0_10 = arith.constant 0 : index
    %12 = vector.load %arg5[%c0_9, %c0_10] : memref<1x10xf32, #tpu.memory_space<vmem>>, vector<1x10xf32>
    %13 = vector.broadcast %12 : vector<1x10xf32> to vector<8x10xf32>
    %14 = arith.addf %11, %13 : vector<8x10xf32>
    %15 = arith.truncf %14 : vector<8x10xf32> to vector<8x10xbf16>
    %c0_11 = arith.constant 0 : index
    %c0_12 = arith.constant 0 : index
    %16 = vector.load %arg6[%c0_11, %c0_12] : memref<10x128xbf16, #tpu.memory_space<vmem>>, vector<10x128xbf16>
    %cst_13 = arith.constant dense<0.000000e+00> : vector<8x128xf32>
    %17 = tpu.matmul %15, %16, %cst_13 {dimension_numbers = #tpu.dot_dimension_numbers<[1], [0], [0], [1], [0, 0, 1, 1], [], []>} : vector<8x10xbf16>, vector<10x128xbf16>, vector<8x128xf32> -> vector<8x128xf32>
    %c0_14 = arith.constant 0 : index
    %c0_15 = arith.constant 0 : index
    %18 = vector.load %arg7[%c0_14, %c0_15] : memref<1x128xf32, #tpu.memory_space<vmem>>, vector<1x128xf32>
    %19 = vector.broadcast %18 : vector<1x128xf32> to vector<8x128xf32>
    %20 = arith.addf %17, %19 : vector<8x128xf32>
    %cst_16 = arith.constant 0.000000e+00 : f32
    %21 = vector.broadcast %cst_16 : f32 to vector<8x128xf32>
    %22 = arith.maximumf %20, %21 : vector<8x128xf32>
    %23 = arith.truncf %22 : vector<8x128xf32> to vector<8x128xbf16>
    %c0_17 = arith.constant 0 : index
    %c0_18 = arith.constant 0 : index
    %24 = vector.load %arg8[%c0_17, %c0_18] : memref<128x32xbf16, #tpu.memory_space<vmem>>, vector<128x32xbf16>
    %cst_19 = arith.constant dense<0.000000e+00> : vector<8x32xf32>
    %25 = tpu.matmul %23, %24, %cst_19 {dimension_numbers = #tpu.dot_dimension_numbers<[1], [0], [0], [1], [0, 0, 1, 1], [], []>} : vector<8x128xbf16>, vector<128x32xbf16>, vector<8x32xf32> -> vector<8x32xf32>
    %c0_20 = arith.constant 0 : index
    %c0_21 = arith.constant 0 : index
    %26 = vector.load %arg9[%c0_20, %c0_21] : memref<1x32xf32, #tpu.memory_space<vmem>>, vector<1x32xf32>
    %27 = vector.broadcast %26 : vector<1x32xf32> to vector<8x32xf32>
    %28 = arith.addf %25, %27 : vector<8x32xf32>
    %c0_22 = arith.constant 0 : index
    %c0_23 = arith.constant 0 : index
    %29 = vector.load %arg11[%c0_22, %c0_23] : memref<8x10xf32, #tpu.memory_space<vmem>>, vector<8x10xf32>
    tpu.vector_store %arg11[%c0_22, %c0_23], %14 {strides = array<i32>} : memref<8x10xf32, #tpu.memory_space<vmem>>, vector<8x10xf32>,
    %c0_24 = arith.constant 0 : index
    %c0_25 = arith.constant 0 : index
    %30 = vector.load %arg10[%c0_24, %c0_25] : memref<8x32xf32, #tpu.memory_space<vmem>>, vector<8x32xf32>
    tpu.vector_store %arg10[%c0_24, %c0_25], %28 {strides = array<i32>} : memref<8x32xf32, #tpu.memory_space<vmem>>, vector<8x32xf32>,
    return
  }
  func.func @transform_0(%arg0: i32) -> (i32, i32) {
    %c0_i32 = arith.constant 0 : i32
    %c0_i32_0 = arith.constant 0 : i32
    return %arg0, %c0_i32 : i32, i32
  }
  func.func @transform_1(%arg0: i32) -> (i32, i32) {
    %c0_i32 = arith.constant 0 : i32
    %c0_i32_0 = arith.constant 0 : i32
    %c0_i32_1 = arith.constant 0 : i32
    return %c0_i32, %c0_i32_0 : i32, i32
  }
  func.func @transform_2(%arg0: i32) -> (i32, i32) {
    %c0_i32 = arith.constant 0 : i32
    %c0_i32_0 = arith.constant 0 : i32
    %c0_i32_1 = arith.constant 0 : i32
    return %c0_i32, %c0_i32_0 : i32, i32
  }
  func.func @transform_3(%arg0: i32) -> (i32, i32) {
    %c0_i32 = arith.constant 0 : i32
    %c0_i32_0 = arith.constant 0 : i32
    %c0_i32_1 = arith.constant 0 : i32
    return %c0_i32, %c0_i32_0 : i32, i32
  }
  func.func @transform_4(%arg0: i32) -> (i32, i32) {
    %c0_i32 = arith.constant 0 : i32
    %c0_i32_0 = arith.constant 0 : i32
    %c0_i32_1 = arith.constant 0 : i32
    return %c0_i32, %c0_i32_0 : i32, i32
  }
  func.func @transform_5(%arg0: i32) -> (i32, i32) {
    %c0_i32 = arith.constant 0 : i32
    %c0_i32_0 = arith.constant 0 : i32
    %c0_i32_1 = arith.constant 0 : i32
    return %c0_i32, %c0_i32_0 : i32, i32
  }
  func.func @transform_6(%arg0: i32) -> (i32, i32) {
    %c0_i32 = arith.constant 0 : i32
    %c0_i32_0 = arith.constant 0 : i32
    %c0_i32_1 = arith.constant 0 : i32
    return %c0_i32, %c0_i32_0 : i32, i32
  }
  func.func @transform_7(%arg0: i32) -> (i32, i32) {
    %c0_i32 = arith.constant 0 : i32
    %c0_i32_0 = arith.constant 0 : i32
    %c0_i32_1 = arith.constant 0 : i32
    return %c0_i32, %c0_i32_0 : i32, i32
  }
  func.func @transform_8(%arg0: i32) -> (i32, i32) {
    %c0_i32 = arith.constant 0 : i32
    %c0_i32_0 = arith.constant 0 : i32
    %c0_i32_1 = arith.constant 0 : i32
    return %c0_i32, %c0_i32_0 : i32, i32
  }
  func.func @transform_9(%arg0: i32) -> (i32, i32) {
    %c0_i32 = arith.constant 0 : i32
    %c0_i32_0 = arith.constant 0 : i32
    return %arg0, %c0_i32 : i32, i32
  }
  func.func @transform_10(%arg0: i32) -> (i32, i32) {
    %c0_i32 = arith.constant 0 : i32
    %c0_i32_0 = arith.constant 0 : i32
    return %arg0, %c0_i32 : i32, i32
  }
}

</mosaic_0001>

<llo_original>
// kernel: tpu_custom_call.1
$region0: #{tpu_custom_call.1}
  #allocation0 [shape = 'u32[]', space=smem, size = 0x4, offset = 0x4, fixed_abs, tag = 'smem constant byte address 0x4 - core index']
  #allocation1 [shape = 'u32[144,128]{1,0:T(1,128)}', space=vmem, size = 0x12000, scoped, tag = 'internal scratch']
  %s0 = inlined_call_operand.vmem [shape: f32[8,32], index: 0, kind: input, shape index: {}]
  %s1 = inlined_call_operand.vmem [shape: bf16[32,128], index: 1, kind: input, shape index: {}]
  %s2 = inlined_call_operand.vmem [shape: f32[1,128], index: 2, kind: input, shape index: {}]
  %s3 = inlined_call_operand.vmem [shape: bf16[128,10], index: 3, kind: input, shape index: {}]
  %s4 = inlined_call_operand.vmem [shape: f32[1,10], index: 4, kind: input, shape index: {}]
  %s5 = inlined_call_operand.vmem [shape: bf16[10,128], index: 5, kind: input, shape index: {}]
  %s6 = inlined_call_operand.vmem [shape: f32[1,128], index: 6, kind: input, shape index: {}]
  %s7 = inlined_call_operand.vmem [shape: bf16[128,32], index: 7, kind: input, shape index: {}]
  %s8 = inlined_call_operand.vmem [shape: f32[1,32], index: 8, kind: input, shape index: {}]
  %s9 = inlined_call_operand.hbm [shape: f32[8,32], index: 9, kind: output, shape index: {0}]
  %s10 = inlined_call_operand.hbm [shape: f32[8,10], index: 10, kind: output, shape index: {1}]
  %11 = xla_tuple %s9, %s10
  %s12 = sld [smem:[#allocation0]]
  $region54: #{tpu_custom_call.1} parent=0
    _
  %s14 = ssub.s32 1, %s12
  %s15 = scalar_select 0, %s14, %s12
  $region1: #{tpu_custom_call.1} parent=0
    #allocation2 [shape = 'u8[4096]{0}', space=vmem, size = 0x1000, scoped, tag = 'output window, operand 0, single buffered']
    #allocation3 [shape = 's32[1]{0}', space=sflag, size = 0x4, scoped, tag = 'scoped memory for tpu_custom_call.1']
    #allocation4 [shape = 'u8[4096]{0}', space=vmem, size = 0x1000, scoped, tag = 'output window, operand 1, single buffered']
    #allocation5 [shape = 's32[1]{0}', space=sflag, size = 0x4, scoped, tag = 'scoped memory for tpu_custom_call.1']
    %16 = vsyncpa [#allocation3], 0
    %17 = vsyncpa [#allocation5], 0
    // Predicated region
    $region2: #{tpu_custom_call.1} parent=1 // pred_check
      _
    $region3: #{tpu_custom_call.1} parent=1 // pred_check_branch
      %19 = sbr.rel (0) target = $region5
    $region4: #{tpu_custom_call.1} parent=1 // pred_region
      _
    $region5: #{tpu_custom_call.1} parent=1 // pred_fallthru
      _
    // Predicated region
    $region6: #{tpu_custom_call.1} parent=1 // pred_check
      _
    $region7: #{tpu_custom_call.1} parent=1 // pred_check_branch
      %21 = sbr.rel (0) target = $region9
    $region8: #{tpu_custom_call.1} parent=1 // pred_region
      _
    $region9: #{tpu_custom_call.1} parent=1 // pred_fallthru
      _
    // Predicated region
    $region10: #{tpu_custom_call.1} parent=1 // pred_check
      _
    $region11: #{tpu_custom_call.1} parent=1 // pred_check_branch
      %23 = sbr.rel (0) target = $region13
    $region12: #{tpu_custom_call.1} parent=1 // pred_region
      _
    $region13: #{tpu_custom_call.1} parent=1 // pred_fallthru
      _
    // Predicated region
    $region14: #{tpu_custom_call.1} parent=1 // pred_check
      _
    $region15: #{tpu_custom_call.1} parent=1 // pred_check_branch
      %25 = sbr.rel (0) target = $region17
    $region16: #{tpu_custom_call.1} parent=1 // pred_region
      _
    $region17: #{tpu_custom_call.1} parent=1 // pred_fallthru
      _
    // Predicated region
    $region18: #{tpu_custom_call.1} parent=1 // pred_check
      _
    $region19: #{tpu_custom_call.1} parent=1 // pred_check_branch
      %27 = sbr.rel (0) target = $region21
    $region20: #{tpu_custom_call.1} parent=1 // pred_region
      _
    $region21: #{tpu_custom_call.1} parent=1 // pred_fallthru
      _
    // Predicated region
    $region22: #{tpu_custom_call.1} parent=1 // pred_check
      _
    $region23: #{tpu_custom_call.1} parent=1 // pred_check_branch
      %29 = sbr.rel (0) target = $region25
    $region24: #{tpu_custom_call.1} parent=1 // pred_region
      _
    $region25: #{tpu_custom_call.1} parent=1 // pred_fallthru
      _
    // Predicated region
    $region26: #{tpu_custom_call.1} parent=1 // pred_check
      _
    $region27: #{tpu_custom_call.1} parent=1 // pred_check_branch
      %31 = sbr.rel (0) target = $region29
    $region28: #{tpu_custom_call.1} parent=1 // pred_region
      _
    $region29: #{tpu_custom_call.1} parent=1 // pred_fallthru
      _
    // Predicated region
    $region30: #{tpu_custom_call.1} parent=1 // pred_check
      _
    $region31: #{tpu_custom_call.1} parent=1 // pred_check_branch
      %33 = sbr.rel (0) target = $region33
    $region32: #{tpu_custom_call.1} parent=1 // pred_region
      _
    $region33: #{tpu_custom_call.1} parent=1 // pred_fallthru
      _
    // Predicated region
    $region34: #{tpu_custom_call.1} parent=1 // pred_check
      _
    $region35: #{tpu_custom_call.1} parent=1 // pred_check_branch
      %35 = sbr.rel (0) target = $region37
    $region36: #{tpu_custom_call.1} parent=1 // pred_region
      _
    $region37: #{tpu_custom_call.1} parent=1 // pred_fallthru
      _
    %v37 = vld [vmem:[%s0] sm:$0xff]
    %v38 = vpack.c.bf16 %v37, %v37
    %v39 = vld [vmem:[%s1] sm:$0xf]
    %v40 = vld [vmem:[%s1 + $0x4] sm:$0xf]
    %v41 = vld [vmem:[%s1 + $0x8] sm:$0xf]
    %v42 = vld [vmem:[%s1 + $0xc] sm:$0xf]
    %v43 = vld [vmem:[%s2] sm:$0x1]
    %v45 = vlaneseq
    %v46 = vshrl.u32 %v45, 7
    %v47 = vsub.s32 0, %v46
    %v48 = vrot.slane %v43, %v47
    %v54 = vunpack.c.l.b16 %v39
    %v55 = vunpack.c.l.b16 %v40
    %v56 = vunpack.c.l.b16 %v41
    %v57 = vunpack.c.l.b16 %v42
    %v58 = vpack.c.b16 %v55, %v54
    %v59 = vpack.c.b16 %v57, %v56
    %vm62 = vcmask 261120
    %v64 = vsel %vm62, %v38, 0
    %66 = vmatprep.subr.bf16.mxu0 0
    %67 = vmatpush1.bf16.msra.mxu0 0
    %68 = vmatprep.subr.bf16.mxu0 0
    %69 = vmatpush1.bf16.msra.mxu0 0
    %70 = vmatprep.subr.bf16.mxu0 0
    %71 = vmatpush1.bf16.msra.mxu0 0
    %72 = vmatprep.subr.bf16.mxu0 0
    %73 = vmatpush1.bf16.msra.mxu0 0
    %74 = vmatprep.subr.bf16.mxu0 0
    %75 = vmatpush1.bf16.msra.mxu0 0
    %76 = vmatprep.subr.bf16.mxu0 0
    %77 = vmatpush1.bf16.msra.mxu0 0
    %78 = vmatprep.subr.bf16.mxu0 0
    %79 = vmatpush1.bf16.msra.mxu0 %v59
    %80 = vmatprep.subr.bf16.mxu0 0
    %81 = vmatpush1.bf16.msra.mxu0 %v58
    %82 = vmatprep.subr.bf16.mxu0 0
    %83 = vmatpush2.bf16.msra.mxu0 0
    %84 = vmatprep.subr.bf16.mxu0 0
    %85 = vmatpush2.bf16.msra.mxu0 0
    %86 = vmatprep.subr.bf16.mxu0 0
    %87 = vmatpush2.bf16.msra.mxu0 0
    %88 = vmatprep.subr.bf16.mxu0 0
    %89 = vmatpush2.bf16.msra.mxu0 0
    %90 = vmatprep.subr.bf16.mxu0 0
    %91 = vmatpush2.bf16.msra.mxu0 0
    %92 = vmatprep.subr.bf16.mxu0 0
    %93 = vmatpush2.bf16.msra.mxu0 0
    %94 = vmatprep.subr.bf16.mxu0 0
    %95 = vmatpush2.bf16.msra.mxu0 0
    %96 = vmatprep.subr.bf16.mxu0 0
    %97 = vmatpush2.bf16.msra.mxu0 0
    %98 = vmatprep.mubr.bf16.mxu0 0
    %99 = vmatmul.mubr.bf16.gmra.mxu0 %v64
    %v100 = vpop.f32.mrf.mxu0
    %v101 = vadd.f32 %v48, %v100
    %v102 = vpop.f32.mrf.mxu0
    %v103 = vpop.f32.mrf.mxu0
    %v104 = vpop.f32.mrf.mxu0
    %105 = vdwg.mxu0
    %v106 = vmax.f32 %v101, 0.0
    %v107 = vpack.c.bf16 %v106, %v106
    %v108 = vld [vmem:[%s3] sm:$0xf]
    %v109 = vld [vmem:[%s3 + $0x4] sm:$0xf]
    %v110 = vld [vmem:[%s3 + $0x8] sm:$0xf]
    %v111 = vld [vmem:[%s3 + $0xc] sm:$0xf]
    %v112 = vld [vmem:[%s3 + $0x10] sm:$0xf]
    %v113 = vld [vmem:[%s3 + $0x14] sm:$0xf]
    %v114 = vld [vmem:[%s3 + $0x18] sm:$0xf]
    %v115 = vld [vmem:[%s3 + $0x1c] sm:$0xf]
    %v116 = vld [vmem:[%s3 + $0x20] sm:$0xf]
    %v117 = vld [vmem:[%s3 + $0x24] sm:$0xf]
    %v118 = vld [vmem:[%s3 + $0x28] sm:$0xf]
    %v119 = vld [vmem:[%s3 + $0x2c] sm:$0xf]
    %v120 = vld [vmem:[%s3 + $0x30] sm:$0xf]
    %v121 = vld [vmem:[%s3 + $0x34] sm:$0xf]
    %v122 = vld [vmem:[%s3 + $0x38] sm:$0xf]
    %v123 = vld [vmem:[%s3 + $0x3c] sm:$0xf]
    %v124 = vld [vmem:[%s4] sm:$0x1]
    %v126 = vlaneseq
    %v127 = vshrl.u32 %v126, 7
    %v128 = vsub.s32 0, %v127
    %v129 = vrot.slane %v124, %v128
    %v147 = vunpack.c.l.b16 %v108
    %v148 = vunpack.c.l.b16 %v109
    %v149 = vunpack.c.l.b16 %v110
    %v150 = vunpack.c.l.b16 %v111
    %v151 = vunpack.c.l.b16 %v112
    %v152 = vunpack.c.l.b16 %v113
    %v153 = vunpack.c.l.b16 %v114
    %v154 = vunpack.c.l.b16 %v115
    %v155 = vunpack.c.l.b16 %v116
    %v156 = vunpack.c.l.b16 %v117
    %v157 = vunpack.c.l.b16 %v118
    %v158 = vunpack.c.l.b16 %v119
    %v159 = vunpack.c.l.b16 %v120
    %v160 = vunpack.c.l.b16 %v121
    %v161 = vunpack.c.l.b16 %v122
    %v162 = vunpack.c.l.b16 %v123
    %v163 = vpack.c.b16 %v148, %v147
    %v164 = vpack.c.b16 %v150, %v149
    %v165 = vpack.c.b16 %v152, %v151
    %v166 = vpack.c.b16 %v154, %v153
    %v167 = vpack.c.b16 %v156, %v155
    %v168 = vpack.c.b16 %v158, %v157
    %v169 = vpack.c.b16 %v160, %v159
    %v170 = vpack.c.b16 %v162, %v161
    %179 = vmatprep.subr.bf16.mxu0 0
    %180 = vmatpush1.bf16.msra.mxu0 %v170
    %181 = vmatprep.subr.bf16.mxu0 0
    %182 = vmatpush1.bf16.msra.mxu0 %v169
    %183 = vmatprep.subr.bf16.mxu0 0
    %184 = vmatpush1.bf16.msra.mxu0 %v168
    %185 = vmatprep.subr.bf16.mxu0 0
    %186 = vmatpush1.bf16.msra.mxu0 %v167
    %187 = vmatprep.subr.bf16.mxu0 0
    %188 = vmatpush1.bf16.msra.mxu0 %v166
    %189 = vmatprep.subr.bf16.mxu0 0
    %190 = vmatpush1.bf16.msra.mxu0 %v165
    %191 = vmatprep.subr.bf16.mxu0 0
    %192 = vmatpush1.bf16.msra.mxu0 %v164
    %193 = vmatprep.subr.bf16.mxu0 0
    %194 = vmatpush1.bf16.msra.mxu0 %v163
    %195 = vmatprep.subr.bf16.mxu0 0
    %196 = vmatpush2.bf16.msra.mxu0 0
    %197 = vmatprep.subr.bf16.mxu0 0
    %198 = vmatpush2.bf16.msra.mxu0 0
    %199 = vmatprep.subr.bf16.mxu0 0
    %200 = vmatpush2.bf16.msra.mxu0 0
    %201 = vmatprep.subr.bf16.mxu0 0
    %202 = vmatpush2.bf16.msra.mxu0 0
    %203 = vmatprep.subr.bf16.mxu0 0
    %204 = vmatpush2.bf16.msra.mxu0 0
    %205 = vmatprep.subr.bf16.mxu0 0
    %206 = vmatpush2.bf16.msra.mxu0 0
    %207 = vmatprep.subr.bf16.mxu0 0
    %208 = vmatpush2.bf16.msra.mxu0 0
    %209 = vmatprep.subr.bf16.mxu0 0
    %210 = vmatpush2.bf16.msra.mxu0 0
    %211 = vmatprep.mubr.bf16.mxu0 0
    %212 = vmatmul.mubr.bf16.gmra.mxu0 %v107
    %v213 = vpop.f32.mrf.mxu0
    %v214 = vadd.f32 %v129, %v213
    %v215 = vpop.f32.mrf.mxu0
    %v216 = vpop.f32.mrf.mxu0
    %v217 = vpop.f32.mrf.mxu0
    %218 = vdwg.mxu0
    %v219 = vpack.c.bf16 %v214, %v214
    %v220 = vld [vmem:[%s5] sm:$0xf]
    %v221 = vld [vmem:[%s5 + $0x4] sm:$0x1]
    %v222 = vld [vmem:[%s6] sm:$0x1]
    %v224 = vlaneseq
    %v225 = vshrl.u32 %v224, 7
    %v226 = vsub.s32 0, %v225
    %v227 = vrot.slane %v222, %v226
    %v231 = vunpack.c.l.b16 %v220
    %v232 = vunpack.c.l.b16 %v221
    %v233 = vpack.c.b16 %v232, %v231
    %vm234 = vcmask 80896
    %v236 = vsel %vm234, %v219, 0
    %vm238 = vcmask 1044480
    %v240 = vsel %vm238, %v233, 0
    %242 = vmatprep.subr.bf16.mxu0 0
    %243 = vmatpush1.bf16.msra.mxu0 0
    %244 = vmatprep.subr.bf16.mxu0 0
    %245 = vmatpush1.bf16.msra.mxu0 0
    %246 = vmatprep.subr.bf16.mxu0 0
    %247 = vmatpush1.bf16.msra.mxu0 0
    %248 = vmatprep.subr.bf16.mxu0 0
    %249 = vmatpush1.bf16.msra.mxu0 0
    %250 = vmatprep.subr.bf16.mxu0 0
    %251 = vmatpush1.bf16.msra.mxu0 0
    %252 = vmatprep.subr.bf16.mxu0 0
    %253 = vmatpush1.bf16.msra.mxu0 0
    %254 = vmatprep.subr.bf16.mxu0 0
    %255 = vmatpush1.bf16.msra.mxu0 0
    %256 = vmatprep.subr.bf16.mxu0 0
    %257 = vmatpush1.bf16.msra.mxu0 %v240
    %258 = vmatprep.subr.bf16.mxu0 0
    %259 = vmatpush2.bf16.msra.mxu0 0
    %260 = vmatprep.subr.bf16.mxu0 0
    %261 = vmatpush2.bf16.msra.mxu0 0
    %262 = vmatprep.subr.bf16.mxu0 0
    %263 = vmatpush2.bf16.msra.mxu0 0
    %264 = vmatprep.subr.bf16.mxu0 0
    %265 = vmatpush2.bf16.msra.mxu0 0
    %266 = vmatprep.subr.bf16.mxu0 0
    %267 = vmatpush2.bf16.msra.mxu0 0
    %268 = vmatprep.subr.bf16.mxu0 0
    %269 = vmatpush2.bf16.msra.mxu0 0
    %270 = vmatprep.subr.bf16.mxu0 0
    %271 = vmatpush2.bf16.msra.mxu0 0
    %272 = vmatprep.subr.bf16.mxu0 0
    %273 = vmatpush2.bf16.msra.mxu0 0
    %274 = vmatprep.mubr.bf16.mxu0 0
    %275 = vmatmul.mubr.bf16.gmra.mxu0 %v236
    %v276 = vpop.f32.mrf.mxu0
    %v277 = vadd.f32 %v227, %v276
    %v278 = vpop.f32.mrf.mxu0
    %v279 = vpop.f32.mrf.mxu0
    %v280 = vpop.f32.mrf.mxu0
    %281 = vdwg.mxu0
    %v282 = vmax.f32 %v277, 0.0
    %v283 = vpack.c.bf16 %v282, %v282
    %v284 = vld [vmem:[%s7] sm:$0xf]
    %v285 = vld [vmem:[%s7 + $0x4] sm:$0xf]
    %v286 = vld [vmem:[%s7 + $0x8] sm:$0xf]
    %v287 = vld [vmem:[%s7 + $0xc] sm:$0xf]
    %v288 = vld [vmem:[%s7 + $0x10] sm:$0xf]
    %v289 = vld [vmem:[%s7 + $0x14] sm:$0xf]
    %v290 = vld [vmem:[%s7 + $0x18] sm:$0xf]
    %v291 = vld [vmem:[%s7 + $0x1c] sm:$0xf]
    %v292 = vld [vmem:[%s7 + $0x20] sm:$0xf]
    %v293 = vld [vmem:[%s7 + $0x24] sm:$0xf]
    %v294 = vld [vmem:[%s7 + $0x28] sm:$0xf]
    %v295 = vld [vmem:[%s7 + $0x2c] sm:$0xf]
    %v296 = vld [vmem:[%s7 + $0x30] sm:$0xf]
    %v297 = vld [vmem:[%s7 + $0x34] sm:$0xf]
    %v298 = vld [vmem:[%s7 + $0x38] sm:$0xf]
    %v299 = vld [vmem:[%s7 + $0x3c] sm:$0xf]
    %v300 = vld [vmem:[%s8] sm:$0x1]
    %v302 = vlaneseq
    %v303 = vshrl.u32 %v302, 7
    %v304 = vsub.s32 0, %v303
    %v305 = vrot.slane %v300, %v304
    %v323 = vunpack.c.l.b16 %v284
    %v324 = vunpack.c.l.b16 %v285
    %v325 = vunpack.c.l.b16 %v286
    %v326 = vunpack.c.l.b16 %v287
    %v327 = vunpack.c.l.b16 %v288
    %v328 = vunpack.c.l.b16 %v289
    %v329 = vunpack.c.l.b16 %v290
    %v330 = vunpack.c.l.b16 %v291
    %v331 = vunpack.c.l.b16 %v292
    %v332 = vunpack.c.l.b16 %v293
    %v333 = vunpack.c.l.b16 %v294
    %v334 = vunpack.c.l.b16 %v295
    %v335 = vunpack.c.l.b16 %v296
    %v336 = vunpack.c.l.b16 %v297
    %v337 = vunpack.c.l.b16 %v298
    %v338 = vunpack.c.l.b16 %v299
    %v339 = vpack.c.b16 %v324, %v323
    %v340 = vpack.c.b16 %v326, %v325
    %v341 = vpack.c.b16 %v328, %v327
    %v342 = vpack.c.b16 %v330, %v329
    %v343 = vpack.c.b16 %v332, %v331
    %v344 = vpack.c.b16 %v334, %v333
    %v345 = vpack.c.b16 %v336, %v335
    %v346 = vpack.c.b16 %v338, %v337
    %355 = vmatprep.subr.bf16.mxu0 0
    %356 = vmatpush1.bf16.msra.mxu0 %v346
    %357 = vmatprep.subr.bf16.mxu0 0
    %358 = vmatpush1.bf16.msra.mxu0 %v345
    %359 = vmatprep.subr.bf16.mxu0 0
    %360 = vmatpush1.bf16.msra.mxu0 %v344
    %361 = vmatprep.subr.bf16.mxu0 0
    %362 = vmatpush1.bf16.msra.mxu0 %v343
    %363 = vmatprep.subr.bf16.mxu0 0
    %364 = vmatpush1.bf16.msra.mxu0 %v342
    %365 = vmatprep.subr.bf16.mxu0 0
    %366 = vmatpush1.bf16.msra.mxu0 %v341
    %367 = vmatprep.subr.bf16.mxu0 0
    %368 = vmatpush1.bf16.msra.mxu0 %v340
    %369 = vmatprep.subr.bf16.mxu0 0
    %370 = vmatpush1.bf16.msra.mxu0 %v339
    %371 = vmatprep.subr.bf16.mxu0 0
    %372 = vmatpush2.bf16.msra.mxu0 0
    %373 = vmatprep.subr.bf16.mxu0 0
    %374 = vmatpush2.bf16.msra.mxu0 0
    %375 = vmatprep.subr.bf16.mxu0 0
    %376 = vmatpush2.bf16.msra.mxu0 0
    %377 = vmatprep.subr.bf16.mxu0 0
    %378 = vmatpush2.bf16.msra.mxu0 0
    %379 = vmatprep.subr.bf16.mxu0 0
    %380 = vmatpush2.bf16.msra.mxu0 0
    %381 = vmatprep.subr.bf16.mxu0 0
    %382 = vmatpush2.bf16.msra.mxu0 0
    %383 = vmatprep.subr.bf16.mxu0 0
    %384 = vmatpush2.bf16.msra.mxu0 0
    %385 = vmatprep.subr.bf16.mxu0 0
    %386 = vmatpush2.bf16.msra.mxu0 0
    %387 = vmatprep.mubr.bf16.mxu0 0
    %388 = vmatmul.mubr.bf16.gmra.mxu0 %v283
    %v389 = vpop.f32.mrf.mxu0
    %v390 = vadd.f32 %v305, %v389
    %v391 = vpop.f32.mrf.mxu0
    %v392 = vpop.f32.mrf.mxu0
    %v393 = vpop.f32.mrf.mxu0
    %394 = vdwg.mxu0
    %395 = vst.msk [vmem:[#allocation4] sm:$0xff] %vm234, %v214
    %396 = vst.msk [vmem:[#allocation2] sm:$0xff] %vm62, %v390
    // Predicated region
    $region38: #{tpu_custom_call.1} parent=1 // pred_check
      _
    $region39: #{tpu_custom_call.1} parent=1 // pred_check_branch
      %398 = sbr.rel (0) target = $region41
    $region40: #{tpu_custom_call.1} parent=1 // pred_region
      %s400 = ssub.s32 128, 128
      %401 = vsyncadd [#allocation3], %s400
      %s403 = sshll.u32 [#allocation2], 4
      %s404 = int_to_ptr.vmem [resolvable:$true] %s403
      %406 = dma.vmem_to_hbm [thread:$0]  %s404, 128, %s9, [#allocation3]
    $region41: #{tpu_custom_call.1} parent=1 // pred_fallthru
      _
    // Predicated region
    $region42: #{tpu_custom_call.1} parent=1 // pred_check
      _
    $region43: #{tpu_custom_call.1} parent=1 // pred_check_branch
      %408 = sbr.rel (0) target = $region45
    $region44: #{tpu_custom_call.1} parent=1 // pred_region
      %s410 = ssub.s32 128, 128
      %411 = vsyncadd [#allocation5], %s410
      %s413 = sshll.u32 [#allocation4], 4
      %s414 = int_to_ptr.vmem [resolvable:$true] %s413
      %416 = dma.vmem_to_hbm [thread:$0]  %s414, 128, %s10, [#allocation5]
    $region45: #{tpu_custom_call.1} parent=1 // pred_fallthru
      _
    // Predicated region
    $region46: #{tpu_custom_call.1} parent=1 // pred_check
      _
    $region47: #{tpu_custom_call.1} parent=1 // pred_check_branch
      %418 = sbr.rel (0) target = $region49
    $region48: #{tpu_custom_call.1} parent=1 // pred_region
      %419 = dma.done [#allocation3], 128
    $region49: #{tpu_custom_call.1} parent=1 // pred_fallthru
      _
    // Predicated region
    $region50: #{tpu_custom_call.1} parent=1 // pred_check
      _
    $region51: #{tpu_custom_call.1} parent=1 // pred_check_branch
      %421 = sbr.rel (0) target = $region53
    $region52: #{tpu_custom_call.1} parent=1 // pred_region
      %422 = dma.done [#allocation5], 128
    $region53: #{tpu_custom_call.1} parent=1 // pred_fallthru
      _
    %423 = vsyncpa [#allocation3], 1
    %424 = vsyncpa [#allocation5], 1

</llo_original>
